<compile_context>
chip_gen: v6e
topology: v6e:2x2x1
jax: 0.10.0
libtpu: 0.0.40
codegen_flags: <defaults>
</compile_context>

<pallas_src>
import functools

import jax
import jax.numpy as jnp
from jax.experimental import pallas as pl
from jax.experimental.pallas import tpu as pltpu

SUBLANE = 8  # f32 sublane width


def _round_up(n, m):
    return (n + m - 1) // m * m


def _sigmoid(z):
    # exp -> EUP, reciprocal -> EUP (full precision); keeps VALU slots free.
    return pl.reciprocal(1.0 + jnp.exp(-z), approx=False)


def mlp_kernel(x_ref, w1_ref, b1_ref, w2_ref, b2_ref, out_ref):
    x = x_ref[...]
    # Layer 1: sigmoid(x @ W1 + b1)
    z1 = jnp.dot(x, w1_ref[...], preferred_element_type=jnp.float32) + b1_ref[...]
    h = _sigmoid(z1)
    # Layer 2: sigmoid(h @ W2 + b2)
    z2 = jnp.dot(h, w2_ref[...], preferred_element_type=jnp.float32) + b2_ref[...]
    out_ref[...] = _sigmoid(z2).astype(out_ref.dtype)


def _default_tile_b(B):
    # Aim for >= 2 grid steps (v7x megacore sharding) for larger B, while
    # capping the per-step tile so double-buffered x/out tiles plus the
    # lane-padded hidden activation stay a few MiB (safe vs. 32 MiB scoped
    # VMEM on every chip). Small B runs as a single grid step.
    half = _round_up(pl.cdiv(B, 2), SUBLANE)
    return max(SUBLANE, min(8192, half))


@functools.partial(jax.jit, static_argnames=("tile_b",))
def mlp_forward(x, w1, b1, w2, b2, *, tile_b=None):
    """x: (B, K); w1: (K, H1); b1: (1, H1); w2: (H1, N); b2: (1, N). float32."""
    f32 = jnp.float32
    x = x.astype(f32)
    w1 = w1.astype(f32)
    b1 = b1.reshape(1, -1).astype(f32)
    w2 = w2.astype(f32)
    b2 = b2.reshape(1, -1).astype(f32)

    B, K = x.shape
    H1 = w1.shape[1]
    N = w2.shape[1]

    if tile_b is None:
        tile_b = _default_tile_b(B)
    tile_b = max(SUBLANE, _round_up(tile_b, SUBLANE))

    # Pad only the batch dim (inside jit, fuses cheaply); feature dims stay
    # unpadded in HBM.
    Bp = _round_up(B, tile_b)
    if Bp != B:
        x = jnp.pad(x, ((0, Bp - B), (0, 0)))

    grid = (Bp // tile_b,)

    flops = 2 * Bp * (K * H1 + H1 * N)
    transcendentals = Bp * (H1 + N)
    bytes_accessed = 4 * (Bp * K + K * H1 + H1 + H1 * N + N + Bp * N)

    out_p = pl.pallas_call(
        mlp_kernel,
        out_shape=jax.ShapeDtypeStruct((Bp, N), f32),
        grid=grid,
        in_specs=[
            # x: tiled along batch, auto double-buffered across the grid.
            pl.BlockSpec((tile_b, K), lambda i: (i, 0)),
            # Weights / biases: full-extent blocks, constant index -> resident
            # in VMEM for the whole grid.
            pl.BlockSpec((K, H1), lambda i: (0, 0)),
            pl.BlockSpec((1, H1), lambda i: (0, 0)),
            pl.BlockSpec((H1, N), lambda i: (0, 0)),
            pl.BlockSpec((1, N), lambda i: (0, 0)),
        ],
        out_specs=pl.BlockSpec((tile_b, N), lambda i: (i, 0)),
        compiler_params=pltpu.CompilerParams(
            dimension_semantics=("parallel",),   # shard batch across TCs (v7x)
            vmem_limit_bytes=32 * 1024 * 1024,   # safe on v5e/v6e/v7x
        ),
        cost_estimate=pl.CostEstimate(
            flops=flops,
            transcendentals=transcendentals,
            bytes_accessed=bytes_accessed,
        ),
    )(x, w1, b1, w2, b2)

    return out_p[:B] if Bp != B else out_p


def reference_forward(x, w1, b1, w2, b2):
    h = jax.nn.sigmoid(x @ w1 + b1)
    return jax.nn.sigmoid(h @ w2 + b2)


if __name__ == "__main__":
    # Small shapes consistent with Model(input_size, H1, output_size)
    batch, input_size, H1, output_size = 8, 16, 32, 4

    key = jax.random.PRNGKey(0)
    kx, kw1, kb1, kw2, kb2 = jax.random.split(key, 5)

    x = jax.random.normal(kx, (batch, input_size), dtype=jnp.float32)

    # Deterministic parameter init (PyTorch nn.Linear-style uniform bounds).
    bound1 = 1.0 / (input_size ** 0.5)
    w1 = jax.random.uniform(kw1, (input_size, H1), jnp.float32, -bound1, bound1)
    b1 = jax.random.uniform(kb1, (1, H1), jnp.float32, -bound1, bound1)
    bound2 = 1.0 / (H1 ** 0.5)
    w2 = jax.random.uniform(kw2, (H1, output_size), jnp.float32, -bound2, bound2)
    b2 = jax.random.uniform(kb2, (1, output_size), jnp.float32, -bound2, bound2)

    out = mlp_forward(x, w1, b1, w2, b2)
    out = jax.block_until_ready(out)

    ref = reference_forward(x, w1, b1, w2, b2)
    assert out.shape == (batch, output_size)
    assert jnp.allclose(out, ref, atol=1e-5, rtol=1e-5), "mismatch vs reference"

    print("KERNEL_OK")
</pallas_src>

<mosaic_0001>
module attributes {stable_mosaic.version = 11 : i64} {
  func.func @mlp_kernel(%arg0: i32, %arg1: memref<8x16xf32, #tpu.memory_space<vmem>>, %arg2: memref<16x32xf32, #tpu.memory_space<vmem>>, %arg3: memref<1x32xf32, #tpu.memory_space<vmem>>, %arg4: memref<32x4xf32, #tpu.memory_space<vmem>>, %arg5: memref<1x4xf32, #tpu.memory_space<vmem>>, %arg6: memref<8x4xf32, #tpu.memory_space<vmem>>) attributes {dimension_semantics = [#tpu.dimension_semantics<parallel>], iteration_bounds = array<i64: 1>, scalar_prefetch = 0 : i64, scratch_operands = 0 : i64, tpu.core_type = #tpu.core_type<tc>, window_params = [{transform_indices = @transform_0, window_bounds = array<i64: 8, 16>}, {pipeline_mode = #tpu.pipeline_mode<synchronous>, transform_indices = @transform_1, window_bounds = array<i64: 16, 32>}, {pipeline_mode = #tpu.pipeline_mode<synchronous>, transform_indices = @transform_2, window_bounds = array<i64: 1, 32>}, {pipeline_mode = #tpu.pipeline_mode<synchronous>, transform_indices = @transform_3, window_bounds = array<i64: 32, 4>}, {pipeline_mode = #tpu.pipeline_mode<synchronous>, transform_indices = @transform_4, window_bounds = array<i64: 1, 4>}, {transform_indices = @transform_5, window_bounds = array<i64: 8, 4>}]} {
    %c0 = arith.constant 0 : index
    %c0_0 = arith.constant 0 : index
    %0 = vector.load %arg1[%c0, %c0_0] : memref<8x16xf32, #tpu.memory_space<vmem>>, vector<8x16xf32>
    %c0_1 = arith.constant 0 : index
    %c0_2 = arith.constant 0 : index
    %1 = vector.load %arg2[%c0_1, %c0_2] : memref<16x32xf32, #tpu.memory_space<vmem>>, vector<16x32xf32>
    %cst = arith.constant dense<0.000000e+00> : vector<8x32xf32>
    %2 = tpu.matmul %0, %1, %cst {dimension_numbers = #tpu.dot_dimension_numbers<[1], [0], [0], [1], [0, 0, 1, 1], [], []>} : vector<8x16xf32>, vector<16x32xf32>, vector<8x32xf32> -> vector<8x32xf32>
    %c0_3 = arith.constant 0 : index
    %c0_4 = arith.constant 0 : index
    %3 = vector.load %arg3[%c0_3, %c0_4] : memref<1x32xf32, #tpu.memory_space<vmem>>, vector<1x32xf32>
    %4 = vector.broadcast %3 : vector<1x32xf32> to vector<8x32xf32>
    %5 = arith.addf %2, %4 : vector<8x32xf32>
    %cst_5 = arith.constant 0.000000e+00 : f32
    %6 = vector.broadcast %cst_5 : f32 to vector<8x32xf32>
    %7 = arith.subf %6, %5 : vector<8x32xf32>
    %8 = math.exp %7 : vector<8x32xf32>
    %cst_6 = arith.constant 1.000000e+00 : f32
    %9 = vector.broadcast %cst_6 : f32 to vector<8x32xf32>
    %10 = arith.addf %9, %8 : vector<8x32xf32>
    %11 = tpu.reciprocal %10 : vector<8x32xf32> -> vector<8x32xf32>
    %c0_7 = arith.constant 0 : index
    %c0_8 = arith.constant 0 : index
    %12 = vector.load %arg4[%c0_7, %c0_8] : memref<32x4xf32, #tpu.memory_space<vmem>>, vector<32x4xf32>
    %cst_9 = arith.constant dense<0.000000e+00> : vector<8x4xf32>
    %13 = tpu.matmul %11, %12, %cst_9 {dimension_numbers = #tpu.dot_dimension_numbers<[1], [0], [0], [1], [0, 0, 1, 1], [], []>} : vector<8x32xf32>, vector<32x4xf32>, vector<8x4xf32> -> vector<8x4xf32>
    %c0_10 = arith.constant 0 : index
    %c0_11 = arith.constant 0 : index
    %14 = vector.load %arg5[%c0_10, %c0_11] : memref<1x4xf32, #tpu.memory_space<vmem>>, vector<1x4xf32>
    %15 = vector.broadcast %14 : vector<1x4xf32> to vector<8x4xf32>
    %16 = arith.addf %13, %15 : vector<8x4xf32>
    %cst_12 = arith.constant 0.000000e+00 : f32
    %17 = vector.broadcast %cst_12 : f32 to vector<8x4xf32>
    %18 = arith.subf %17, %16 : vector<8x4xf32>
    %19 = math.exp %18 : vector<8x4xf32>
    %cst_13 = arith.constant 1.000000e+00 : f32
    %20 = vector.broadcast %cst_13 : f32 to vector<8x4xf32>
    %21 = arith.addf %20, %19 : vector<8x4xf32>
    %22 = tpu.reciprocal %21 : vector<8x4xf32> -> vector<8x4xf32>
    %c0_14 = arith.constant 0 : index
    %c0_15 = arith.constant 0 : index
    %23 = vector.load %arg6[%c0_14, %c0_15] : memref<8x4xf32, #tpu.memory_space<vmem>>, vector<8x4xf32>
    tpu.vector_store %arg6[%c0_14, %c0_15], %22 {strides = array<i32>} : memref<8x4xf32, #tpu.memory_space<vmem>>, vector<8x4xf32>,
    return
  }
  func.func @transform_0(%arg0: i32) -> (i32, i32) {
    %c0_i32 = arith.constant 0 : i32
    %c0_i32_0 = arith.constant 0 : i32
    return %arg0, %c0_i32 : i32, i32
  }
  func.func @transform_1(%arg0: i32) -> (i32, i32) {
    %c0_i32 = arith.constant 0 : i32
    %c0_i32_0 = arith.constant 0 : i32
    %c0_i32_1 = arith.constant 0 : i32
    return %c0_i32, %c0_i32_0 : i32, i32
  }
  func.func @transform_2(%arg0: i32) -> (i32, i32) {
    %c0_i32 = arith.constant 0 : i32
    %c0_i32_0 = arith.constant 0 : i32
    %c0_i32_1 = arith.constant 0 : i32
    return %c0_i32, %c0_i32_0 : i32, i32
  }
  func.func @transform_3(%arg0: i32) -> (i32, i32) {
    %c0_i32 = arith.constant 0 : i32
    %c0_i32_0 = arith.constant 0 : i32
    %c0_i32_1 = arith.constant 0 : i32
    return %c0_i32, %c0_i32_0 : i32, i32
  }
  func.func @transform_4(%arg0: i32) -> (i32, i32) {
    %c0_i32 = arith.constant 0 : i32
    %c0_i32_0 = arith.constant 0 : i32
    %c0_i32_1 = arith.constant 0 : i32
    return %c0_i32, %c0_i32_0 : i32, i32
  }
  func.func @transform_5(%arg0: i32) -> (i32, i32) {
    %c0_i32 = arith.constant 0 : i32
    %c0_i32_0 = arith.constant 0 : i32
    return %arg0, %c0_i32 : i32, i32
  }
}

</mosaic_0001>

<llo_original>
// kernel: mlp_forward.1
$region0: #{mlp_forward.1}
  #allocation0 [shape = 'u32[]', space=smem, size = 0x4, offset = 0x4, fixed_abs, tag = 'smem constant byte address 0x4 - core index']
  #allocation1 [shape = 'u32[144,128]{1,0:T(1,128)}', space=vmem, size = 0x12000, scoped, tag = 'internal scratch']
  %s0 = inlined_call_operand.vmem [shape: f32[8,16], index: 0, kind: input, shape index: {}]
  %s1 = inlined_call_operand.vmem [shape: f32[16,32], index: 1, kind: input, shape index: {}]
  %s2 = inlined_call_operand.vmem [shape: f32[1,32], index: 2, kind: input, shape index: {}]
  %s3 = inlined_call_operand.vmem [shape: f32[32,4], index: 3, kind: input, shape index: {}]
  %s4 = inlined_call_operand.vmem [shape: f32[1,4], index: 4, kind: input, shape index: {}]
  %s5 = inlined_call_operand.vmem [shape: f32[8,4], index: 5, kind: output, shape index: {}]
  %s6 = sld [smem:[#allocation0]]
  $region30: #{mlp_forward.1} parent=0
    _
  %s8 = ssub.s32 1, %s6
  %s9 = scalar_select 0, %s8, %s6
  // Predicated region
  $region2: #{mlp_forward.1} parent=0 // pred_check
    _
  $region3: #{mlp_forward.1} parent=0 // pred_check_branch
    %11 = sbr.rel (0) target = $region5
  $region4: #{mlp_forward.1} parent=0 // pred_region
    _
  $region5: #{mlp_forward.1} parent=0 // pred_fallthru
    _
  // Predicated region
  $region6: #{mlp_forward.1} parent=0 // pred_check
    _
  $region7: #{mlp_forward.1} parent=0 // pred_check_branch
    %13 = sbr.rel (0) target = $region9
  $region8: #{mlp_forward.1} parent=0 // pred_region
    _
  $region9: #{mlp_forward.1} parent=0 // pred_fallthru
    _
  // Predicated region
  $region10: #{mlp_forward.1} parent=0 // pred_check
    _
  $region11: #{mlp_forward.1} parent=0 // pred_check_branch
    %15 = sbr.rel (0) target = $region13
  $region12: #{mlp_forward.1} parent=0 // pred_region
    _
  $region13: #{mlp_forward.1} parent=0 // pred_fallthru
    _
  // Predicated region
  $region14: #{mlp_forward.1} parent=0 // pred_check
    _
  $region15: #{mlp_forward.1} parent=0 // pred_check_branch
    %17 = sbr.rel (0) target = $region17
  $region16: #{mlp_forward.1} parent=0 // pred_region
    _
  $region17: #{mlp_forward.1} parent=0 // pred_fallthru
    _
  // Predicated region
  $region18: #{mlp_forward.1} parent=0 // pred_check
    _
  $region19: #{mlp_forward.1} parent=0 // pred_check_branch
    %19 = sbr.rel (0) target = $region21
  $region20: #{mlp_forward.1} parent=0 // pred_region
    _
  $region21: #{mlp_forward.1} parent=0 // pred_fallthru
    _
  %v20 = vld [vmem:[%s0] sm:$0xff]
  %v21 = vld [vmem:[%s1] sm:$0xff]
  %v22 = vld [vmem:[%s1 + $0x8] sm:$0xff]
  %v23 = vld [vmem:[%s2] sm:$0x1]
  %v25 = vlaneseq
  %v26 = vshrl.u32 %v25, 7
  %v27 = vsub.s32 0, %v26
  %v28 = vrot.slane %v23, %v27
  %vm30 = vcmask 130048
  %v32 = vsel %vm30, %v20, 0
  %34 = vmatprep.subr.mxu0 0.0
  %35 = vmatpush1.msra.mxu0 0.0
  %36 = vmatprep.subr.mxu0 0.0
  %37 = vmatpush1.msra.mxu0 0.0
  %38 = vmatprep.subr.mxu0 0.0
  %39 = vmatpush1.msra.mxu0 0.0
  %40 = vmatprep.subr.mxu0 0.0
  %41 = vmatpush1.msra.mxu0 0.0
  %42 = vmatprep.subr.mxu0 0.0
  %43 = vmatpush1.msra.mxu0 0.0
  %44 = vmatprep.subr.mxu0 0.0
  %45 = vmatpush1.msra.mxu0 0.0
  %46 = vmatprep.subr.mxu0 0.0
  %47 = vmatpush1.msra.mxu0 0.0
  %48 = vmatprep.subr.mxu0 0.0
  %49 = vmatpush1.msra.mxu0 0.0
  %50 = vmatprep.subr.mxu0 0.0
  %51 = vmatpush1.msra.mxu0 0.0
  %52 = vmatprep.subr.mxu0 0.0
  %53 = vmatpush1.msra.mxu0 0.0
  %54 = vmatprep.subr.mxu0 0.0
  %55 = vmatpush1.msra.mxu0 0.0
  %56 = vmatprep.subr.mxu0 0.0
  %57 = vmatpush1.msra.mxu0 0.0
  %58 = vmatprep.subr.mxu0 0.0
  %59 = vmatpush1.msra.mxu0 0.0
  %60 = vmatprep.subr.mxu0 0.0
  %61 = vmatpush1.msra.mxu0 0.0
  %62 = vmatprep.subr.mxu0 0.0
  %63 = vmatpush1.msra.mxu0 %v22
  %64 = vmatprep.subr.mxu0 0.0
  %65 = vmatpush1.msra.mxu0 %v21
  %66 = vmatprep.subr.mxu0 0.0
  %67 = vmatpush2.msra.mxu0 0.0
  %68 = vmatprep.subr.mxu0 0.0
  %69 = vmatpush2.msra.mxu0 0.0
  %70 = vmatprep.subr.mxu0 0.0
  %71 = vmatpush2.msra.mxu0 0.0
  %72 = vmatprep.subr.mxu0 0.0
  %73 = vmatpush2.msra.mxu0 0.0
  %74 = vmatprep.subr.mxu0 0.0
  %75 = vmatpush2.msra.mxu0 0.0
  %76 = vmatprep.subr.mxu0 0.0
  %77 = vmatpush2.msra.mxu0 0.0
  %78 = vmatprep.subr.mxu0 0.0
  %79 = vmatpush2.msra.mxu0 0.0
  %80 = vmatprep.subr.mxu0 0.0
  %81 = vmatpush2.msra.mxu0 0.0
  %82 = vmatprep.subr.mxu0 0.0
  %83 = vmatpush2.msra.mxu0 0.0
  %84 = vmatprep.subr.mxu0 0.0
  %85 = vmatpush2.msra.mxu0 0.0
  %86 = vmatprep.subr.mxu0 0.0
  %87 = vmatpush2.msra.mxu0 0.0
  %88 = vmatprep.subr.mxu0 0.0
  %89 = vmatpush2.msra.mxu0 0.0
  %90 = vmatprep.subr.mxu0 0.0
  %91 = vmatpush2.msra.mxu0 0.0
  %92 = vmatprep.subr.mxu0 0.0
  %93 = vmatpush2.msra.mxu0 0.0
  %94 = vmatprep.subr.mxu0 0.0
  %95 = vmatpush2.msra.mxu0 0.0
  %96 = vmatprep.subr.mxu0 0.0
  %97 = vmatpush2.msra.mxu0 0.0
  %98 = vmatprep.mubr.f32.mxu0 0.0
  %99 = vmatmul.mubr.f32.gmra.mxu0 %v32
  %v100 = vpop.f32.mrf.mxu0
  %v101 = vadd.f32 %v28, %v100
  %v102 = vpop.f32.mrf.mxu0
  %103 = vdwg.mxu0
  %v104 = vsub.f32 0.0, %v101
  %v105 = vmul.f32 %v104, 1.442695
  %v106 = vpow.pop %v105
  %v107 = vadd.f32 %v106, 1.0
  %v108 = vrcp.pop %v107
  %v109 = vld [vmem:[%s3] sm:$0xff]
  %v110 = vld [vmem:[%s3 + $0x8] sm:$0xff]
  %v111 = vld [vmem:[%s3 + $0x10] sm:$0xff]
  %v112 = vld [vmem:[%s3 + $0x18] sm:$0xff]
  %v113 = vld [vmem:[%s4] sm:$0x1]
  %v115 = vlaneseq
  %v116 = vshrl.u32 %v115, 7
  %v117 = vsub.s32 0, %v116
  %v118 = vrot.slane %v113, %v117
  %vm120 = vcmask 261120
  %v122 = vsel %vm120, %v108, 0
  %124 = vmatprep.subr.mxu0 0.0
  %125 = vmatpush1.msra.mxu0 0.0
  %126 = vmatprep.subr.mxu0 0.0
  %127 = vmatpush1.msra.mxu0 0.0
  %128 = vmatprep.subr.mxu0 0.0
  %129 = vmatpush1.msra.mxu0 0.0
  %130 = vmatprep.subr.mxu0 0.0
  %131 = vmatpush1.msra.mxu0 0.0
  %132 = vmatprep.subr.mxu0 0.0
  %133 = vmatpush1.msra.mxu0 0.0
  %134 = vmatprep.subr.mxu0 0.0
  %135 = vmatpush1.msra.mxu0 0.0
  %136 = vmatprep.subr.mxu0 0.0
  %137 = vmatpush1.msra.mxu0 0.0
  %138 = vmatprep.subr.mxu0 0.0
  %139 = vmatpush1.msra.mxu0 0.0
  %140 = vmatprep.subr.mxu0 0.0
  %141 = vmatpush1.msra.mxu0 0.0
  %142 = vmatprep.subr.mxu0 0.0
  %143 = vmatpush1.msra.mxu0 0.0
  %144 = vmatprep.subr.mxu0 0.0
  %145 = vmatpush1.msra.mxu0 0.0
  %146 = vmatprep.subr.mxu0 0.0
  %147 = vmatpush1.msra.mxu0 0.0
  %148 = vmatprep.subr.mxu0 0.0
  %149 = vmatpush1.msra.mxu0 %v112
  %150 = vmatprep.subr.mxu0 0.0
  %151 = vmatpush1.msra.mxu0 %v111
  %152 = vmatprep.subr.mxu0 0.0
  %153 = vmatpush1.msra.mxu0 %v110
  %154 = vmatprep.subr.mxu0 0.0
  %155 = vmatpush1.msra.mxu0 %v109
  %156 = vmatprep.subr.mxu0 0.0
  %157 = vmatpush2.msra.mxu0 0.0
  %158 = vmatprep.subr.mxu0 0.0
  %159 = vmatpush2.msra.mxu0 0.0
  %160 = vmatprep.subr.mxu0 0.0
  %161 = vmatpush2.msra.mxu0 0.0
  %162 = vmatprep.subr.mxu0 0.0
  %163 = vmatpush2.msra.mxu0 0.0
  %164 = vmatprep.subr.mxu0 0.0
  %165 = vmatpush2.msra.mxu0 0.0
  %166 = vmatprep.subr.mxu0 0.0
  %167 = vmatpush2.msra.mxu0 0.0
  %168 = vmatprep.subr.mxu0 0.0
  %169 = vmatpush2.msra.mxu0 0.0
  %170 = vmatprep.subr.mxu0 0.0
  %171 = vmatpush2.msra.mxu0 0.0
  %172 = vmatprep.subr.mxu0 0.0
  %173 = vmatpush2.msra.mxu0 0.0
  %174 = vmatprep.subr.mxu0 0.0
  %175 = vmatpush2.msra.mxu0 0.0
  %176 = vmatprep.subr.mxu0 0.0
  %177 = vmatpush2.msra.mxu0 0.0
  %178 = vmatprep.subr.mxu0 0.0
  %179 = vmatpush2.msra.mxu0 0.0
  %180 = vmatprep.subr.mxu0 0.0
  %181 = vmatpush2.msra.mxu0 0.0
  %182 = vmatprep.subr.mxu0 0.0
  %183 = vmatpush2.msra.mxu0 0.0
  %184 = vmatprep.subr.mxu0 0.0
  %185 = vmatpush2.msra.mxu0 0.0
  %186 = vmatprep.subr.mxu0 0.0
  %187 = vmatpush2.msra.mxu0 0.0
  %188 = vmatprep.mubr.f32.mxu0 0.0
  %189 = vmatmul.mubr.f32.gmra.mxu0 %v122
  %v190 = vpop.f32.mrf.mxu0
  %v191 = vadd.f32 %v118, %v190
  %v192 = vpop.f32.mrf.mxu0
  %193 = vdwg.mxu0
  %v194 = vsub.f32 0.0, %v191
  %v195 = vmul.f32 %v194, 1.442695
  %v196 = vpow.pop %v195
  %v197 = vadd.f32 %v196, 1.0
  %v198 = vrcp.pop %v197
  %vm199 = vcmask 31744
  %200 = vst.msk [vmem:[%s5] sm:$0xff] %vm199, %v198
  // Predicated region
  $region22: #{mlp_forward.1} parent=0 // pred_check
    _
  $region23: #{mlp_forward.1} parent=0 // pred_check_branch
    %202 = sbr.rel (0) target = $region25
  $region24: #{mlp_forward.1} parent=0 // pred_region
    _
  $region25: #{mlp_forward.1} parent=0 // pred_fallthru
    _
  // Predicated region
  $region26: #{mlp_forward.1} parent=0 // pred_check
    _
  $region27: #{mlp_forward.1} parent=0 // pred_check_branch
    %204 = sbr.rel (0) target = $region29
  $region28: #{mlp_forward.1} parent=0 // pred_region
    _
  $region29: #{mlp_forward.1} parent=0 // pred_fallthru
    _

</llo_original>
